<compile_context>
chip_gen: v7x
topology: tpu7x:2x2x1
jax: 0.10.0
libtpu: 0.0.40
codegen_flags: <defaults>
</compile_context>

<pallas_src>
import functools

import numpy as np
import jax
import jax.numpy as jnp
from jax import lax
from jax.experimental import pallas as pl
from jax.experimental.pallas import tpu as pltpu


# --------------------------------------------------------------------------- weights
def _build_fused_weights(w_up, b_up, w_t, b_t, cin_pad):
    """Fold both branches into one (2*Cout, 3*2*2*Cin_pad) matmul weight.

    Rows = (py, co)  [row parity major].  Cols = (r, dx, q, ci) where r = py + dy is the
    input-row tap, dx the input-column tap, q the output-column parity and ci the (padded)
    input channel.  Built with constant selection tensors (numpy) + two einsums so the HLO
    stays clean (no long .at[].set chains).
    """
    cout, cin = w_up.shape[0], w_up.shape[1]

    # Host-side constant selectors: s[py, px, dy, dx, ky, kx] = 1 if kernel tap (ky, kx)
    # of that branch, at output parity (py, px), reads original-input offset (dy, dx).
    s_up = np.zeros((2, 2, 2, 2, 3, 3), np.float32)
    s_t = np.zeros((2, 2, 2, 2, 3, 3), np.float32)
    for py in range(2):
        for px in range(2):
            # nearest-upsample -> 3x3 conv branch
            for ky in range(3):
                dy = (py - 1 + ky) // 2 - (py - 1)
                for kx in range(3):
                    dx = (px - 1 + kx) // 2 - (px - 1)
                    s_up[py, px, dy, dx, ky, kx] += 1.0
            # ConvTranspose2d(stride=2, pad=1, out_pad=1): only parity-matching taps
            for ky in range(3):
                if (ky + py) % 2 == 0:
                    continue
                dy = (py + 1 - ky) // 2 - (py - 1)
                for kx in range(3):
                    if (kx + px) % 2 == 0:
                        continue
                    dx = (px + 1 - kx) // 2 - (px - 1)
                    s_t[py, px, dy, dx, ky, kx] += 1.0
    # r = py + dy fold selector
    t_sel = np.zeros((2, 3, 2), np.float32)
    for py in range(2):
        for dy in range(2):
            t_sel[py, py + dy, dy] = 1.0

    wu = jnp.transpose(w_up, (2, 3, 1, 0)).astype(jnp.float32)   # (ky, kx, ci, co)
    wt = jnp.transpose(w_t, (2, 3, 0, 1)).astype(jnp.float32)    # (ky, kx, ci, co)

    # a[py, px, dy, dx, ci, co]
    a = (jnp.einsum('pqyxkl,klio->pqyxio', jnp.asarray(s_up), wu)
         + jnp.einsum('pqyxkl,klio->pqyxio', jnp.asarray(s_t), wt))

    # wk[py, co, r, dx, q, ci] = a[py, q, r - py, dx, ci, co]  (zero when r-py not in {0,1})
    wk = jnp.einsum('prd,pqdxio->porxqi', jnp.asarray(t_sel), a)      # (2, cout, 3, 2, 2, cin)
    wk = jnp.pad(wk, ((0, 0),) * 5 + ((0, cin_pad - cin),))
    wk = wk.reshape(2 * cout, 3 * 2 * 2 * cin_pad).astype(jnp.bfloat16)

    bias = (b_up + b_t).astype(jnp.float32)
    bias2 = jnp.concatenate([bias, bias]).reshape(2 * cout, 1)        # rows = (py, co)
    return wk, bias2


# --------------------------------------------------------------------------- kernel
def _fused_block_kernel(u_ref, wk_ref, b_ref, o_ref, *, cout, width, th):
    # u_ref : (1, 4*Cin_pad, (H+2)*2W) bf16   channels = (dx, parity, ci), rows lane-flattened
    # wk_ref: (2*Cout, 12*Cin_pad)     bf16   rows = (py, co), cols = (r, dx, q, ci)
    # b_ref : (2*Cout, 1)              f32
    # o_ref : (1, Cout, th*4W)         f32    lane-dense output tile (= 2*th NCHW rows)
    w2 = 2 * width
    t = pl.program_id(1)

    # One aligned dynamic lane slice covering the th+2 input rows of this tile.
    start = pl.multiple_of(t * (th * w2), th * w2)
    window = u_ref[0, :, pl.ds(start, (th + 2) * w2)]               # (4*Cin_pad, (th+2)*2W)

    # Patch K layout (r, dx, q, ci); (dx, q, ci) already lives in the channel axis,
    # so only the 3 r-shifted static lane slices + one aligned concat remain.
    patch = jnp.concatenate(
        [window[:, r * w2: r * w2 + th * w2] for r in range(3)], axis=0)   # (12*Cin_pad, th*2W)

    # Single batched MXU matmul for the whole row tile (N = th*2W).
    acc = jnp.dot(wk_ref[...], patch, preferred_element_type=jnp.float32)  # (2*Cout, th*2W)
    acc = acc + b_ref[...]

    # Interleave row parity into (co, ii, py, col) and emit one lane-dense store.
    top = acc[:cout].reshape(cout, th, w2)          # py = 0 rows
    bot = acc[cout:].reshape(cout, th, w2)          # py = 1 rows
    tile = jnp.concatenate([top, bot], axis=-1)     # (cout, th, 2*2W) = (co, ii, py*2W+col)
    o_ref[0, :, :] = tile.reshape(cout, th * 2 * w2)


# --------------------------------------------------------------------------- wrapper
def _pick_th(h, w):
    """Row-pairs per grid step: th | h, th*2W a multiple of 256 (v6e/v7x MXU) if possible."""
    w2 = 2 * w
    divs = [d for d in range(1, h + 1) if h % d == 0]
    for align in (256, 128):
        good = [d for d in divs if (d * w2) % align == 0 and d * w2 <= 2048]
        if good:
            return min(good)          # smallest tile that fills the MXU -> most grid steps
    good = [d for d in divs if d * w2 <= 256]
    return max(good) if good else 1


def last_decoder_block(x_nchw, w_up, b_up, w_t, b_t):
    """x_nchw: (N, Cin, H, W) -> (N, Cout, 2H, 2W), matching the PyTorch module."""
    n, cin, h, w = x_nchw.shape
    cout = w_up.shape[0]
    cin_pad = ((cin + 7) // 8) * 8
    w2 = 2 * w

    # ---- wrapper-side input prep (input bytes are small vs the 4x-upsampled f32 output) ----
    # pad channels to a sublane multiple, pad spatially by 1, duplicate columns so every
    # output lane reads its source column with a static slice, pre-mask by column parity,
    # pre-shift by dx, stack the 4 variants on the channel axis, flatten rows into lanes.
    x_p = jnp.pad(x_nchw, ((0, 0), (0, cin_pad - cin), (0, 0), (0, 0)))
    xpad = jnp.pad(x_p, ((0, 0), (0, 0), (1, 1), (1, 1)))            # (N, Cp, H+2, W+2)
    u = jnp.repeat(xpad, 2, axis=3)[:, :, :, 1:2 * w + 3]            # (N, Cp, H+2, 2W+2)
    even = (jnp.arange(w2 + 2) % 2) == 0
    u_e = jnp.where(even, u, 0.0)
    u_o = jnp.where(even, 0.0, u)
    parts = []
    for dx in (0, 1):                                                # channel = (dx, q, ci)
        for uq in (u_e, u_o):
            parts.append(uq[:, :, :, 2 * dx: 2 * dx + w2])
    big = jnp.concatenate(parts, axis=1)                             # (N, 4*Cp, H+2, 2W)
    big = big.reshape(n, 4 * cin_pad, (h + 2) * w2).astype(jnp.bfloat16)

    wk, bias2 = _build_fused_weights(w_up, b_up, w_t, b_t, cin_pad)

    th = _pick_th(h, w)                         # th=8 for H=W=16 -> N=256 lanes, grid (n, 2)
    grid = (n, h // th)

    kernel = functools.partial(_fused_block_kernel, cout=cout, width=w, th=th)
    out_flat = pl.pallas_call(
        kernel,
        out_shape=jax.ShapeDtypeStruct((n, cout, 2 * h * w2), jnp.float32),
        grid_spec=pltpu.PrefetchScalarGridSpec(
            num_scalar_prefetch=0,
            grid=grid,
            in_specs=[
                # full prepared image per batch element; constant in t -> stays resident
                pl.BlockSpec((1, 4 * cin_pad, (h + 2) * w2), lambda b, t: (b, 0, 0)),
                pl.BlockSpec((2 * cout, 12 * cin_pad), lambda b, t: (0, 0)),
                pl.BlockSpec((2 * cout, 1), lambda b, t: (0, 0)),
            ],
            out_specs=pl.BlockSpec((1, cout, th * 2 * w2), lambda b, t: (b, 0, t)),
        ),
        compiler_params=pltpu.CompilerParams(
            dimension_semantics=("parallel", "parallel")),
    )(big, wk, bias2)

    # (N, Cout, 2H*2W) -> (N, Cout, 2H, 2W): metadata-only reshape (already NCHW order).
    return out_flat.reshape(n, cout, 2 * h, 2 * w)


# --------------------------------------------------------------------------- reference
def _reference(x, w_up, b_up, w_t, b_t):
    dn = ("NCHW", "OIHW", "NCHW")
    up = jnp.repeat(jnp.repeat(x, 2, axis=2), 2, axis=3)
    out_up = lax.conv_general_dilated(
        up, w_up, (1, 1), ((1, 1), (1, 1)),
        dimension_numbers=dn, precision=lax.Precision.HIGHEST,
    ) + b_up[None, :, None, None]
    w_t_oihw = jnp.transpose(w_t[:, :, ::-1, ::-1], (1, 0, 2, 3))
    out_t = lax.conv_general_dilated(
        x, w_t_oihw, (1, 1), ((1, 2), (1, 2)), lhs_dilation=(2, 2),
        dimension_numbers=dn, precision=lax.Precision.HIGHEST,
    ) + b_t[None, :, None, None]
    return out_up + out_t


# --------------------------------------------------------------------------- main
if __name__ == "__main__":
    N, CIN, COUT, H, W = 2, 4, 8, 16, 16
    KER = 3

    key = jax.random.PRNGKey(0)
    k_x, k_wu, k_bu, k_wt, k_bt = jax.random.split(key, 5)

    x = jax.random.normal(k_x, (N, CIN, H, W), dtype=jnp.float32)
    w_up = 0.1 * jax.random.normal(k_wu, (COUT, CIN, KER, KER), dtype=jnp.float32)  # Conv2d weight
    b_up = 0.1 * jax.random.normal(k_bu, (COUT,), dtype=jnp.float32)                # Conv2d bias
    w_t = 0.1 * jax.random.normal(k_wt, (CIN, COUT, KER, KER), dtype=jnp.float32)   # ConvTranspose2d weight
    b_t = 0.1 * jax.random.normal(k_bt, (COUT,), dtype=jnp.float32)                 # ConvTranspose2d bias

    out = jax.jit(last_decoder_block)(x, w_up, b_up, w_t, b_t)
    out = jax.block_until_ready(out)

    ref = _reference(x, w_up, b_up, w_t, b_t)
    assert out.shape == (N, COUT, 2 * H, 2 * W), out.shape
    # bf16 MXU path (f32 accumulation): tolerance loosened accordingly; error grows ~with Cin.
    max_err = float(jnp.max(jnp.abs(out - ref)))
    assert jnp.allclose(out, ref, rtol=5e-2, atol=5e-2), max_err

    print("KERNEL_OK")
</pallas_src>

<mosaic_0001>
module attributes {stable_mosaic.version = 11 : i64} {
  func.func @_fused_block_kernel(%arg0: i32, %arg1: i32, %arg2: memref<1x32x576xbf16, #tpu.memory_space<vmem>>, %arg3: memref<16x96xbf16, #tpu.memory_space<vmem>>, %arg4: memref<16x1xf32, #tpu.memory_space<vmem>>, %arg5: memref<1x8x512xf32, #tpu.memory_space<vmem>>) attributes {dimension_semantics = [#tpu.dimension_semantics<parallel>, #tpu.dimension_semantics<parallel>], iteration_bounds = array<i64: 2, 2>, scalar_prefetch = 0 : i64, scratch_operands = 0 : i64, tpu.core_type = #tpu.core_type<tc>, window_params = [{transform_indices = @transform_0, window_bounds = array<i64: 1, 32, 576>}, {pipeline_mode = #tpu.pipeline_mode<synchronous>, transform_indices = @transform_1, window_bounds = array<i64: 16, 96>}, {pipeline_mode = #tpu.pipeline_mode<synchronous>, transform_indices = @transform_2, window_bounds = array<i64: 16, 1>}, {transform_indices = @transform_3, window_bounds = array<i64: 1, 8, 512>}]} {
    %c256_i32 = arith.constant 256 : i32
    %0 = arith.muli %arg1, %c256_i32 : i32
    %1 = tpu.assume_multiple %0, 256 : i32
    %c0 = arith.constant 0 : index
    %c0_0 = arith.constant 0 : index
    %2 = arith.index_cast %1 : i32 to index
    %3 = vector.load %arg2[%c0, %c0_0, %2] : memref<1x32x576xbf16, #tpu.memory_space<vmem>>, vector<1x32x320xbf16>
    %4 = vector.shape_cast %3 : vector<1x32x320xbf16> to vector<32x320xbf16>
    %5 = vector.extract_strided_slice %4 {offsets = [0, 0], sizes = [32, 256], strides = [1, 1]} : vector<32x320xbf16> to vector<32x256xbf16>
    %6 = vector.extract_strided_slice %4 {offsets = [0, 32], sizes = [32, 256], strides = [1, 1]} : vector<32x320xbf16> to vector<32x256xbf16>
    %7 = vector.extract_strided_slice %4 {offsets = [0, 64], sizes = [32, 256], strides = [1, 1]} : vector<32x320xbf16> to vector<32x256xbf16>
    %8 = tpu.concatenate %5, %6, %7 in 0 : vector<32x256xbf16>, vector<32x256xbf16>, vector<32x256xbf16> -> vector<96x256xbf16>
    %c0_1 = arith.constant 0 : index
    %c0_2 = arith.constant 0 : index
    %9 = vector.load %arg3[%c0_1, %c0_2] : memref<16x96xbf16, #tpu.memory_space<vmem>>, vector<16x96xbf16>
    %cst = arith.constant dense<0.000000e+00> : vector<16x256xf32>
    %10 = tpu.matmul %9, %8, %cst {dimension_numbers = #tpu.dot_dimension_numbers<[1], [0], [0], [1], [0, 0, 1, 1], [], []>} : vector<16x96xbf16>, vector<96x256xbf16>, vector<16x256xf32> -> vector<16x256xf32>
    %c0_3 = arith.constant 0 : index
    %c0_4 = arith.constant 0 : index
    %11 = vector.load %arg4[%c0_3, %c0_4] : memref<16x1xf32, #tpu.memory_space<vmem>>, vector<16x1xf32>
    %12 = vector.broadcast %11 : vector<16x1xf32> to vector<16x256xf32>
    %13 = arith.addf %10, %12 : vector<16x256xf32>
    %14 = vector.extract_strided_slice %13 {offsets = [0, 0], sizes = [8, 256], strides = [1, 1]} : vector<16x256xf32> to vector<8x256xf32>
    %15 = vector.shape_cast %14 : vector<8x256xf32> to vector<8x8x32xf32>
    %16 = vector.extract_strided_slice %13 {offsets = [8, 0], sizes = [8, 256], strides = [1, 1]} : vector<16x256xf32> to vector<8x256xf32>
    %17 = vector.shape_cast %16 : vector<8x256xf32> to vector<8x8x32xf32>
    %18 = tpu.concatenate %15, %17 in 2 : vector<8x8x32xf32>, vector<8x8x32xf32> -> vector<8x8x64xf32>
    %19 = vector.shape_cast %18 : vector<8x8x64xf32> to vector<8x512xf32>
    %c0_5 = arith.constant 0 : index
    %c0_6 = arith.constant 0 : index
    %c0_7 = arith.constant 0 : index
    %20 = vector.load %arg5[%c0_5, %c0_6, %c0_7] : memref<1x8x512xf32, #tpu.memory_space<vmem>>, vector<1x8x512xf32>
    %21 = vector.shape_cast %20 : vector<1x8x512xf32> to vector<8x512xf32>
    %22 = vector.shape_cast %19 : vector<8x512xf32> to vector<1x8x512xf32>
    tpu.vector_store %arg5[%c0_5, %c0_6, %c0_7], %22 {strides = array<i32>} : memref<1x8x512xf32, #tpu.memory_space<vmem>>, vector<1x8x512xf32>,
    return
  }
  func.func @transform_0(%arg0: i32, %arg1: i32) -> (i32, i32, i32) {
    %c0_i32 = arith.constant 0 : i32
    %c0_i32_0 = arith.constant 0 : i32
    %c0_i32_1 = arith.constant 0 : i32
    return %arg0, %c0_i32, %c0_i32_0 : i32, i32, i32
  }
  func.func @transform_1(%arg0: i32, %arg1: i32) -> (i32, i32) {
    %c0_i32 = arith.constant 0 : i32
    %c0_i32_0 = arith.constant 0 : i32
    %c0_i32_1 = arith.constant 0 : i32
    return %c0_i32, %c0_i32_0 : i32, i32
  }
  func.func @transform_2(%arg0: i32, %arg1: i32) -> (i32, i32) {
    %c0_i32 = arith.constant 0 : i32
    %c0_i32_0 = arith.constant 0 : i32
    %c0_i32_1 = arith.constant 0 : i32
    return %c0_i32, %c0_i32_0 : i32, i32
  }
  func.func @transform_3(%arg0: i32, %arg1: i32) -> (i32, i32, i32) {
    %c0_i32 = arith.constant 0 : i32
    %c0_i32_0 = arith.constant 0 : i32
    return %arg0, %c0_i32, %arg1 : i32, i32, i32
  }
}

</mosaic_0001>

<llo_original>
// kernel: last_decoder_block.1
$region0: #{last_decoder_block.1}
  #allocation0 [shape = 'u32[]', space=smem, size = 0x4, offset = 0x4, fixed_abs, tag = 'smem constant byte address 0x4 - core index']
  #allocation1 [shape = 'u32[144,128]{1,0:T(1,128)}', space=vmem, size = 0x12000, scoped, tag = 'internal scratch']
  %s0 = inlined_call_operand.vmem [shape: bf16[2,32,576], index: 0, kind: input, shape index: {}]
  %s1 = inlined_call_operand.vmem [shape: bf16[16,96], index: 1, kind: input, shape index: {}]
  %s2 = inlined_call_operand.vmem [shape: f32[16,1], index: 2, kind: input, shape index: {}]
  %s3 = inlined_call_operand.vmem [shape: f32[2,8,1024], index: 3, kind: output, shape index: {}]
  %s4 = sld [smem:[#allocation0]]
  $region45: #{last_decoder_block.1} parent=0
    _
  %s6 = ssub.s32 1, %s4
  %s7 = scalar_select 0, %s6, %s4
  loop: start=0, step=1, limit=6
  $region2: #{last_decoder_block.1} parent=0 // loop_pre_header
    _
  $region3: #{last_decoder_block.1} parent=0 // loop_header
    %s9 = sphi 0, %s13
    %p10 = scmp.ge.s32.totalorder %s9, 6
    %s16 = sphi 0, %s28
    %s17 = sphi 0, %s24
    %s18 = sphi 0, %s16
    %s19 = sphi 0, %s17
    %s20 = sphi 0, %s18
    %s21 = sphi 0, %s19
    %s31 = sphi 0, %s33
    %s34 = sphi 0, %s31
    %s35 = sphi 0, %s34
    %s51 = sphi 0, %s35
    %s55 = sphi 0, %s55
    %s57 = sphi 0, %s55
    %s58 = sphi 0, %s57
    %s72 = sphi 0, %s58
    %s76 = sphi 0, %s76
    %s78 = sphi 0, %s76
    %s79 = sphi 0, %s78
    %s93 = sphi 0, %s79
    %s101 = sphi 0, %s103
    %s104 = sphi 0, %s101
    %s105 = sphi 0, %s104
    %s121 = sphi 0, %s105
  $region4: #{last_decoder_block.1} parent=0 // loop_header_branch
    %12 = sbr.rel (%p10) target = $region8
  $region5: #{last_decoder_block.1} parent=0 // loop_body
    %s14 = ssub.s32 %s9, 1
    %s15 = ssub.s32 %s9, 2
    %s22 = sadd.s32 1, %s17
    %p23 = scmp.ge.s32.totalorder %s22, 2
    %s24 = scalar_select %p23, 0, %s22
    %s25 = sadd.s32 1, %s16
    %s26 = scalar_select %p23, %s25, %s16
    %p27 = scmp.ge.s32.totalorder %s26, 2
    %s28 = scalar_select %p27, 0, %s26
    %s29 = ssub.s32 %s16, %s28
    %p30 = scmp.eq.s32.totalorder %s29, 0
    %s32 = sadd.s32 %s31, 1
    %s33 = scalar_select %p30, %s31, %s32
    %p36 = pneg %p30
    %p37 = scmp.eq.s32.totalorder %s9, 3
    %p38 = por %p36, %p37
    %p39 = scmp.ne.s32.totalorder %s31, %s34
    %p40 = scmp.eq.s32.totalorder %s9, 0
    %p41 = por %p39, %p40
    %p42 = scmp.ne.s32.totalorder %s31, %s34
    %p43 = scmp.eq.s32.totalorder %s14, 3
    %p44 = por %p42, %p43
    %p45 = scmp.ne.s32.totalorder %s34, %s35
    %p46 = scmp.eq.s32.totalorder %s14, 0
    %p47 = por %p45, %p46
    %p48 = scmp.ne.s32.totalorder %s34, %s35
    %p49 = scmp.eq.s32.totalorder %s15, 3
    %p50 = por %p48, %p49
    %p52 = scmp.ne.s32.totalorder %s35, %s51
    %p53 = scmp.eq.s32.totalorder %s15, 0
    %p54 = por %p52, %p53
    %s56 = sadd.s32 %s55, 1
    %p59 = scmp.eq.s32.totalorder %s9, 3
    %p60 = scmp.ne.s32.totalorder %s55, %s57
    %p61 = scmp.eq.s32.totalorder %s9, 0
    %p62 = por %p60, %p61
    %p63 = scmp.ne.s32.totalorder %s55, %s57
    %p64 = scmp.eq.s32.totalorder %s14, 3
    %p65 = por %p63, %p64
    %p66 = scmp.ne.s32.totalorder %s57, %s58
    %p67 = scmp.eq.s32.totalorder %s14, 0
    %p68 = por %p66, %p67
    %p69 = scmp.ne.s32.totalorder %s57, %s58
    %p70 = scmp.eq.s32.totalorder %s15, 3
    %p71 = por %p69, %p70
    %p73 = scmp.ne.s32.totalorder %s58, %s72
    %p74 = scmp.eq.s32.totalorder %s15, 0
    %p75 = por %p73, %p74
    %s77 = sadd.s32 %s76, 1
    %p80 = scmp.eq.s32.totalorder %s9, 3
    %p81 = scmp.ne.s32.totalorder %s76, %s78
    %p82 = scmp.eq.s32.totalorder %s9, 0
    %p83 = por %p81, %p82
    %p84 = scmp.ne.s32.totalorder %s76, %s78
    %p85 = scmp.eq.s32.totalorder %s14, 3
    %p86 = por %p84, %p85
    %p87 = scmp.ne.s32.totalorder %s78, %s79
    %p88 = scmp.eq.s32.totalorder %s14, 0
    %p89 = por %p87, %p88
    %p90 = scmp.ne.s32.totalorder %s78, %s79
    %p91 = scmp.eq.s32.totalorder %s15, 3
    %p92 = por %p90, %p91
    %p94 = scmp.ne.s32.totalorder %s79, %s93
    %p95 = scmp.eq.s32.totalorder %s15, 0
    %p96 = por %p94, %p95
    %s97 = ssub.s32 %s16, %s28
    %s98 = ssub.s32 %s17, %s24
    %s99 = sor.u32 %s97, %s98
    %p100 = scmp.eq.s32.totalorder %s99, 0
    %s102 = sadd.s32 %s101, 1
    %s103 = scalar_select %p100, %s101, %s102
    %p106 = pneg %p100
    %p107 = scmp.eq.s32.totalorder %s9, 3
    %p108 = por %p106, %p107
    %p109 = scmp.ne.s32.totalorder %s101, %s104
    %p110 = scmp.eq.s32.totalorder %s9, 0
    %p111 = por %p109, %p110
    %p112 = scmp.ne.s32.totalorder %s101, %s104
    %p113 = scmp.eq.s32.totalorder %s14, 3
    %p114 = por %p112, %p113
    %p115 = scmp.ne.s32.totalorder %s104, %s105
    %p116 = scmp.eq.s32.totalorder %s14, 0
    %p117 = por %p115, %p116
    %p118 = scmp.ne.s32.totalorder %s104, %s105
    %p119 = scmp.eq.s32.totalorder %s15, 3
    %p120 = por %p118, %p119
    %p122 = scmp.ne.s32.totalorder %s105, %s121
    %p123 = scmp.eq.s32.totalorder %s15, 0
    %p124 = por %p122, %p123
    %p125 = scmp.le.s32.totalorder 1, %s9
    %p126 = scmp.lt.s32.totalorder %s9, 5
    %p127 = pnand %p125, %p126
    %p128 = pneg %p127
    // Predicated region
    $region9: #{last_decoder_block.1} parent=5 // pred_check
      _
    $region10: #{last_decoder_block.1} parent=5 // pred_check_branch
      %130 = sbr.rel (%p127) target = $region12
    $region11: #{last_decoder_block.1} parent=5 // pred_region
      %s131 = ssub.s32 %s9, 1
      // Predicated region
      $region13: #{last_decoder_block.1} parent=11 // pred_check
        %p132 = pneg %p68
      $region14: #{last_decoder_block.1} parent=11 // pred_check_branch
        %134 = sbr.rel (%p132) target = $region16
      $region15: #{last_decoder_block.1} parent=11 // pred_region
        _
      $region16: #{last_decoder_block.1} parent=11 // pred_fallthru
        _
      // Predicated region
      $region17: #{last_decoder_block.1} parent=11 // pred_check
        %p135 = pneg %p89
      $region18: #{last_decoder_block.1} parent=11 // pred_check_branch
        %137 = sbr.rel (%p135) target = $region20
      $region19: #{last_decoder_block.1} parent=11 // pred_region
        _
      $region20: #{last_decoder_block.1} parent=11 // pred_fallthru
        _
    $region12: #{last_decoder_block.1} parent=5 // pred_fallthru
      _
    %p138 = scmp.lt.s32.totalorder %s9, 4
    // Predicated region
    $region21: #{last_decoder_block.1} parent=5 // pred_check
      %p139 = pneg %p138
    $region22: #{last_decoder_block.1} parent=5 // pred_check_branch
      %141 = sbr.rel (%p139) target = $region24
    $region23: #{last_decoder_block.1} parent=5 // pred_region
      // Predicated region
      $region25: #{last_decoder_block.1} parent=23 // pred_check
        %p142 = pneg %p41
      $region26: #{last_decoder_block.1} parent=23 // pred_check_branch
        %144 = sbr.rel (%p142) target = $region28
      $region27: #{last_decoder_block.1} parent=23 // pred_region
        %p145 = scmp.lt.s32.totalorder %s16, 1
        %s146 = scalar_select %p145, %s16, 1
        %s147 = smul.addr %s146, 20
        %s148 = smul.addr %s147, 4
        %s149 = scalar_lea.vmem %s0, %s148
      $region28: #{last_decoder_block.1} parent=23 // pred_fallthru
        _
    $region24: #{last_decoder_block.1} parent=5 // pred_fallthru
      _
    %p150 = scmp.le.s32.totalorder 1, %s9
    %p151 = scmp.lt.s32.totalorder %s9, 5
    %p152 = pnand %p150, %p151
    %p153 = pneg %p152
    // Predicated region
    $region29: #{last_decoder_block.1} parent=5 // pred_check
      _
    $region30: #{last_decoder_block.1} parent=5 // pred_check_branch
      %155 = sbr.rel (%p152) target = $region32
    $region31: #{last_decoder_block.1} parent=5 // pred_region
      %s156 = ssub.s32 %s9, 1
      %p157 = scmp.lt.s32.totalorder %s18, 1
      %s158 = scalar_select %p157, %s18, 1
      %s159 = smul.addr %s158, 20
      %s160 = smul.addr %s159, 4
      %s161 = scalar_lea.vmem %s0, %s160
      %p162 = pneg %p47
      %p163 = pneg %p44
      %p164 = pneg %p68
      %p165 = pneg %p65
      %p166 = pneg %p89
      %p167 = pneg %p86
      %p168 = pneg %p117
      %p169 = pneg %p114
      %s170 = smul.u32 4, %s19
      %p171 = scmp.lt.s32.totalorder %s18, 1
      %s172 = scalar_select %p171, %s18, 1
      %p173 = scmp.lt.s32.totalorder %s170, 7
      %s174 = scalar_select %p173, %s170, 7
      %s175 = smul.addr %s172, 8
      %s176 = sadd.s32 %s174, %s175
      %s177 = smul.addr %s176, 8
      %s178 = scalar_lea.vmem %s3, %s177
      %p179 = scmp.lt.s32.totalorder %s18, 1
      %s180 = scalar_select %p179, %s18, 1
      %s181 = smul.addr %s180, 20
      %s182 = smul.addr %s181, 4
      %s183 = scalar_lea.vmem %s0, %s182
      %s184 = smul.u32 4, %s19
      %p185 = scmp.lt.s32.totalorder %s18, 1
      %s186 = scalar_select %p185, %s18, 1
      %p187 = scmp.lt.s32.totalorder %s184, 7
      %s188 = scalar_select %p187, %s184, 7
      %s189 = smul.addr %s186, 8
      %s190 = sadd.s32 %s188, %s189
      %s191 = smul.addr %s190, 8
      %s192 = scalar_lea.vmem %s3, %s191
      %s193 = smul.u32 4, %s19
      %s195 = smul.u32 %s19, 256
      %s196 = sshra.s32 %s195, 7
      %s197 = sand.u32 %s195, 127
      %s198 = smul.addr %s196, 4
      %s199 = scalar_lea.vmem %s183, %s198
      %v200 = vld [vmem:[%s199] sm:$0xff]
      %v201 = vld [vmem:[%s199 + $0x8] sm:$0xf]
      %v202 = vld [vmem:[%s199 + $0x14] sm:$0xff]
      %v203 = vld [vmem:[%s199 + $0x1c] sm:$0xf]
      %v204 = vld [vmem:[%s199 + $0x28] sm:$0xff]
      %v205 = vld [vmem:[%s199 + $0x30] sm:$0xf]
      %v206 = vld [vmem:[%s199 + $0x3c] sm:$0xff]
      %v207 = vld [vmem:[%s199 + $0x44] sm:$0xf]
      %v212 = vunpack.c.l.b16 %v200
      %v213 = vunpack.c.h.b16 %v200
      %v214 = vunpack.c.l.b16 %v202
      %v215 = vunpack.c.h.b16 %v202
      %v216 = vunpack.c.l.b16 %v204
      %v217 = vunpack.c.h.b16 %v204
      %v218 = vunpack.c.l.b16 %v206
      %v219 = vunpack.c.h.b16 %v206
      %v220 = vpack.c.b16 %v214, %v212
      %v221 = vpack.c.b16 %v215, %v213
      %v222 = vpack.c.b16 %v218, %v216
      %v223 = vpack.c.b16 %v219, %v217
      %v232 = vunpack.c.l.b16 %v201
      %v233 = vunpack.c.l.b16 %v203
      %v234 = vunpack.c.l.b16 %v205
      %v235 = vunpack.c.l.b16 %v207
      %v236 = vpack.c.b16 %v233, %v232
      %v237 = vpack.c.b16 %v235, %v234
      %238 = vrot.lane.b32.xlu0 %v220, 96
      %v239 = vpop.permute.xlu0 %238
      %240 = vrot.lane.b32.xlu0 %v221, 96
      %v241 = vpop.permute.xlu0 %240
      %242 = vrot.lane.b32.xlu0 %v236, 96
      %v243 = vpop.permute.xlu0 %242
      %244 = vrot.lane.b32.xlu0 %v222, 96
      %v245 = vpop.permute.xlu0 %244
      %246 = vrot.lane.b32.xlu0 %v223, 96
      %v247 = vpop.permute.xlu0 %246
      %248 = vrot.lane.b32.xlu0 %v237, 96
      %v249 = vpop.permute.xlu0 %248
      %vm250 = vcmask 785408
      %v251 = vsel %vm250, %v239, %v241
      %v252 = vsel %vm250, %v241, %v243
      %v253 = vsel %vm250, %v245, %v247
      %v254 = vsel %vm250, %v247, %v249
      %259 = vrot.lane.b32.xlu0 %v220, 64
      %v260 = vpop.permute.xlu0 %259
      %261 = vrot.lane.b32.xlu0 %v221, 64
      %v262 = vpop.permute.xlu0 %261
      %263 = vrot.lane.b32.xlu0 %v236, 64
      %v264 = vpop.permute.xlu0 %263
      %265 = vrot.lane.b32.xlu0 %v222, 64
      %v266 = vpop.permute.xlu0 %265
      %267 = vrot.lane.b32.xlu0 %v223, 64
      %v268 = vpop.permute.xlu0 %267
      %269 = vrot.lane.b32.xlu0 %v237, 64
      %v270 = vpop.permute.xlu0 %269
      %vm271 = vcmask 523264
      %v272 = vsel %vm271, %v260, %v262
      %v273 = vsel %vm271, %v262, %v264
      %v274 = vsel %vm271, %v266, %v268
      %v275 = vsel %vm271, %v268, %v270
      %v280 = vld [vmem:[%s1] sm:$0xf]
      %v281 = vld [vmem:[%s1 + $0x4] sm:$0xf]
      %v282 = vld [vmem:[%s2] sm:$0xff]
      %v283 = vld [vmem:[%s2 + $0x8] sm:$0xff]
      %285 = vset.pattern.permute.xlu0 0
      %286 = vperm.xlu0 %285, %v282
      %v287 = vpop.permute.xlu0 %286
      %290 = vset.pattern.permute.xlu0 0
      %291 = vperm.xlu0 %290, %v283
      %v292 = vpop.permute.xlu0 %291
      %v296 = vunpack.c.l.b16 %v280
      %v297 = vunpack.c.l.b16 %v281
      %v298 = vpack.c.b16 %v297, %v296
      %vm299 = vcmask 785408
      %v301 = vsel %vm299, %v298, 0
      %303 = vmatprep.subr.bf16.mxu0 %v221
      %304 = vmatpush1.bf16.msra.mxu0 %v220
      %305 = vmatprep.subr.bf16.mxu0 %v223
      %306 = vmatpush1.bf16.msra.mxu0 %v222
      %307 = vmatprep.subr.bf16.mxu0 %v252
      %308 = vmatpush1.bf16.msra.mxu0 %v251
      %309 = vmatprep.subr.bf16.mxu0 %v254
      %310 = vmatpush1.bf16.msra.mxu0 %v253
      %311 = vmatprep.subr.bf16.mxu0 %v273
      %312 = vmatpush1.bf16.msra.mxu0 %v272
      %313 = vmatprep.subr.bf16.mxu0 %v275
      %314 = vmatpush1.bf16.msra.mxu0 %v274
      %315 = vmatprep.subr.bf16.mxu0 0
      %316 = vmatpush1.bf16.msra.mxu0 0
      %317 = vmatprep.subr.bf16.mxu0 0
      %318 = vmatpush1.bf16.msra.mxu0 0
      %319 = vmatprep.subr.bf16.mxu0 0
      %320 = vmatpush1.bf16.msra.mxu0 0
      %321 = vmatprep.subr.bf16.mxu0 0
      %322 = vmatpush1.bf16.msra.mxu0 0
      %323 = vmatprep.subr.bf16.mxu0 0
      %324 = vmatpush1.bf16.msra.mxu0 0
      %325 = vmatprep.subr.bf16.mxu0 0
      %326 = vmatpush1.bf16.msra.mxu0 0
      %327 = vmatprep.subr.bf16.mxu0 0
      %328 = vmatpush1.bf16.msra.mxu0 0
      %329 = vmatprep.subr.bf16.mxu0 0
      %330 = vmatpush1.bf16.msra.mxu0 0
      %331 = vmatprep.subr.bf16.mxu0 0
      %332 = vmatpush1.bf16.msra.mxu0 0
      %333 = vmatprep.subr.bf16.mxu0 0
      %334 = vmatpush1.bf16.msra.mxu0 0
      %335 = vmatprep.mubr.bf16.mxu0 0
      %336 = vmatmul.mubr.bf16.gmra.mrb[0].mxu0 %v301
      %v337 = vpop.f32.mrb[0].mxu0
      %v338 = vadd.f32 %v287, %v337
      %v339 = vpop.f32.mrb[0].mxu0
      %v340 = vadd.f32 %v287, %v339
      %v341 = vpop.f32.mrb[0].mxu0
      %v342 = vadd.f32 %v292, %v341
      %v343 = vpop.f32.mrb[0].mxu0
      %v344 = vadd.f32 %v292, %v343
      %345 = vdwg.mxu0
      %347 = vrot.lane.b32.xlu0 %v338, 96
      %v348 = vpop.permute.xlu0 %347
      %350 = vrot.lane.b32.xlu0 %v338, 64
      %v351 = vpop.permute.xlu0 %350
      %353 = vrot.lane.b32.xlu0 %v338, 32
      %v354 = vpop.permute.xlu0 %353
      %357 = vrot.lane.b32.xlu0 %v340, 96
      %v358 = vpop.permute.xlu0 %357
      %360 = vrot.lane.b32.xlu0 %v340, 64
      %v361 = vpop.permute.xlu0 %360
      %363 = vrot.lane.b32.xlu0 %v340, 32
      %v364 = vpop.permute.xlu0 %363
      %v366 = vcombine.low %v338, %v351
      %v367 = vcombine.high %v338, %v351
      %v369 = vunpack.c.l.s4 1983009808
      %v370 = vunpack.c.0.s8 %v369
      %v371 = vlaneseq
      %v372 = vshrl.u32 %v371, 7
      %v373 = vsub.s32 %v370, %v372
      %v374 = vrot.slane %v366, %v373
      %v376 = vunpack.c.l.s4 1983009808
      %v377 = vunpack.c.0.s8 %v376
      %v378 = vlaneseq
      %v379 = vshrl.u32 %v378, 7
      %v380 = vsub.s32 %v377, %v379
      %v381 = vrot.slane %v367, %v380
      %v382 = vcombine.low %v348, %v354
      %v383 = vcombine.high %v348, %v354
      %v385 = vunpack.c.l.s4 1983009808
      %v386 = vunpack.c.0.s8 %v385
      %v387 = vlaneseq
      %v388 = vshrl.u32 %v387, 7
      %v389 = vsub.s32 %v386, %v388
      %v390 = vrot.slane %v382, %v389
      %v392 = vunpack.c.l.s4 1983009808
      %v393 = vunpack.c.0.s8 %v392
      %v394 = vlaneseq
      %v395 = vshrl.u32 %v394, 7
      %v396 = vsub.s32 %v393, %v395
      %v397 = vrot.slane %v383, %v396
      %v398 = vcombine.low %v340, %v361
      %v399 = vcombine.high %v340, %v361
      %v401 = vunpack.c.l.s4 1983009808
      %v402 = vunpack.c.0.s8 %v401
      %v403 = vlaneseq
      %v404 = vshrl.u32 %v403, 7
      %v405 = vsub.s32 %v402, %v404
      %v406 = vrot.slane %v398, %v405
      %v408 = vunpack.c.l.s4 1983009808
      %v409 = vunpack.c.0.s8 %v408
      %v410 = vlaneseq
      %v411 = vshrl.u32 %v410, 7
      %v412 = vsub.s32 %v409, %v411
      %v413 = vrot.slane %v399, %v412
      %v414 = vcombine.low %v358, %v364
      %v415 = vcombine.high %v358, %v364
      %v417 = vunpack.c.l.s4 1983009808
      %v418 = vunpack.c.0.s8 %v417
      %v419 = vlaneseq
      %v420 = vshrl.u32 %v419, 7
      %v421 = vsub.s32 %v418, %v420
      %v422 = vrot.slane %v414, %v421
      %v424 = vunpack.c.l.s4 1983009808
      %v425 = vunpack.c.0.s8 %v424
      %v426 = vlaneseq
      %v427 = vshrl.u32 %v426, 7
      %v428 = vsub.s32 %v425, %v427
      %v429 = vrot.slane %v415, %v428
      %v430 = vcombine.low %v374, %v390
      %v431 = vcombine.high %v374, %v390
      %v433 = vunpack.c.l.s4 1934713408
      %v434 = vunpack.c.0.s8 %v433
      %v435 = vlaneseq
      %v436 = vshrl.u32 %v435, 7
      %v437 = vsub.s32 %v434, %v436
      %v438 = vrot.slane %v430, %v437
      %v440 = vunpack.c.l.s4 1934713408
      %v441 = vunpack.c.0.s8 %v440
      %v442 = vlaneseq
      %v443 = vshrl.u32 %v442, 7
      %v444 = vsub.s32 %v441, %v443
      %v445 = vrot.slane %v431, %v444
      %v446 = vcombine.low %v381, %v397
      %v447 = vcombine.high %v381, %v397
      %v449 = vunpack.c.l.s4 1934713408
      %v450 = vunpack.c.0.s8 %v449
      %v451 = vlaneseq
      %v452 = vshrl.u32 %v451, 7
      %v453 = vsub.s32 %v450, %v452
      %v454 = vrot.slane %v446, %v453
      %v456 = vunpack.c.l.s4 1934713408
      %v457 = vunpack.c.0.s8 %v456
      %v458 = vlaneseq
      %v459 = vshrl.u32 %v458, 7
      %v460 = vsub.s32 %v457, %v459
      %v461 = vrot.slane %v447, %v460
      %v462 = vcombine.low %v406, %v422
      %v463 = vcombine.high %v406, %v422
      %v465 = vunpack.c.l.s4 1934713408
      %v466 = vunpack.c.0.s8 %v465
      %v467 = vlaneseq
      %v468 = vshrl.u32 %v467, 7
      %v469 = vsub.s32 %v466, %v468
      %v470 = vrot.slane %v462, %v469
      %v472 = vunpack.c.l.s4 1934713408
      %v473 = vunpack.c.0.s8 %v472
      %v474 = vlaneseq
      %v475 = vshrl.u32 %v474, 7
      %v476 = vsub.s32 %v473, %v475
      %v477 = vrot.slane %v463, %v476
      %v478 = vcombine.low %v413, %v429
      %v479 = vcombine.high %v413, %v429
      %v481 = vunpack.c.l.s4 1934713408
      %v482 = vunpack.c.0.s8 %v481
      %v483 = vlaneseq
      %v484 = vshrl.u32 %v483, 7
      %v485 = vsub.s32 %v482, %v484
      %v486 = vrot.slane %v478, %v485
      %v488 = vunpack.c.l.s4 1934713408
      %v489 = vunpack.c.0.s8 %v488
      %v490 = vlaneseq
      %v491 = vshrl.u32 %v490, 7
      %v492 = vsub.s32 %v489, %v491
      %v493 = vrot.slane %v479, %v492
      %v494 = vcombine.low %v438, %v470
      %v495 = vcombine.high %v438, %v470
      %v496 = vcombine.low %v445, %v477
      %v497 = vcombine.high %v445, %v477
      %v498 = vcombine.low %v454, %v486
      %v499 = vcombine.high %v454, %v486
      %v500 = vcombine.low %v461, %v493
      %v501 = vcombine.high %v461, %v493
      %503 = vrot.lane.b32.xlu0 %v342, 96
      %v504 = vpop.permute.xlu0 %503
      %506 = vrot.lane.b32.xlu0 %v342, 64
      %v507 = vpop.permute.xlu0 %506
      %509 = vrot.lane.b32.xlu0 %v342, 32
      %v510 = vpop.permute.xlu0 %509
      %513 = vrot.lane.b32.xlu0 %v344, 96
      %v514 = vpop.permute.xlu0 %513
      %516 = vrot.lane.b32.xlu0 %v344, 64
      %v517 = vpop.permute.xlu0 %516
      %519 = vrot.lane.b32.xlu0 %v344, 32
      %v520 = vpop.permute.xlu0 %519
      %v522 = vcombine.low %v342, %v507
      %v523 = vcombine.high %v342, %v507
      %v525 = vunpack.c.l.s4 1983009808
      %v526 = vunpack.c.0.s8 %v525
      %v527 = vlaneseq
      %v528 = vshrl.u32 %v527, 7
      %v529 = vsub.s32 %v526, %v528
      %v530 = vrot.slane %v522, %v529
      %v532 = vunpack.c.l.s4 1983009808
      %v533 = vunpack.c.0.s8 %v532
      %v534 = vlaneseq
      %v535 = vshrl.u32 %v534, 7
      %v536 = vsub.s32 %v533, %v535
      %v537 = vrot.slane %v523, %v536
      %v538 = vcombine.low %v504, %v510
      %v539 = vcombine.high %v504, %v510
      %v541 = vunpack.c.l.s4 1983009808
      %v542 = vunpack.c.0.s8 %v541
      %v543 = vlaneseq
      %v544 = vshrl.u32 %v543, 7
      %v545 = vsub.s32 %v542, %v544
      %v546 = vrot.slane %v538, %v545
      %v548 = vunpack.c.l.s4 1983009808
      %v549 = vunpack.c.0.s8 %v548
      %v550 = vlaneseq
      %v551 = vshrl.u32 %v550, 7
      %v552 = vsub.s32 %v549, %v551
      %v553 = vrot.slane %v539, %v552
      %v554 = vcombine.low %v344, %v517
      %v555 = vcombine.high %v344, %v517
      %v557 = vunpack.c.l.s4 1983009808
      %v558 = vunpack.c.0.s8 %v557
      %v559 = vlaneseq
      %v560 = vshrl.u32 %v559, 7
      %v561 = vsub.s32 %v558, %v560
      %v562 = vrot.slane %v554, %v561
      %v564 = vunpack.c.l.s4 1983009808
      %v565 = vunpack.c.0.s8 %v564
      %v566 = vlaneseq
      %v567 = vshrl.u32 %v566, 7
      %v568 = vsub.s32 %v565, %v567
      %v569 = vrot.slane %v555, %v568
      %v570 = vcombine.low %v514, %v520
      %v571 = vcombine.high %v514, %v520
      %v573 = vunpack.c.l.s4 1983009808
      %v574 = vunpack.c.0.s8 %v573
      %v575 = vlaneseq
      %v576 = vshrl.u32 %v575, 7
      %v577 = vsub.s32 %v574, %v576
      %v578 = vrot.slane %v570, %v577
      %v580 = vunpack.c.l.s4 1983009808
      %v581 = vunpack.c.0.s8 %v580
      %v582 = vlaneseq
      %v583 = vshrl.u32 %v582, 7
      %v584 = vsub.s32 %v581, %v583
      %v585 = vrot.slane %v571, %v584
      %v586 = vcombine.low %v530, %v546
      %v587 = vcombine.high %v530, %v546
      %v589 = vunpack.c.l.s4 1934713408
      %v590 = vunpack.c.0.s8 %v589
      %v591 = vlaneseq
      %v592 = vshrl.u32 %v591, 7
      %v593 = vsub.s32 %v590, %v592
      %v594 = vrot.slane %v586, %v593
      %v596 = vunpack.c.l.s4 1934713408
      %v597 = vunpack.c.0.s8 %v596
      %v598 = vlaneseq
      %v599 = vshrl.u32 %v598, 7
      %v600 = vsub.s32 %v597, %v599
      %v601 = vrot.slane %v587, %v600
      %v602 = vcombine.low %v537, %v553
      %v603 = vcombine.high %v537, %v553
      %v605 = vunpack.c.l.s4 1934713408
      %v606 = vunpack.c.0.s8 %v605
      %v607 = vlaneseq
      %v608 = vshrl.u32 %v607, 7
      %v609 = vsub.s32 %v606, %v608
      %v610 = vrot.slane %v602, %v609
      %v612 = vunpack.c.l.s4 1934713408
      %v613 = vunpack.c.0.s8 %v612
      %v614 = vlaneseq
      %v615 = vshrl.u32 %v614, 7
      %v616 = vsub.s32 %v613, %v615
      %v617 = vrot.slane %v603, %v616
      %v618 = vcombine.low %v562, %v578
      %v619 = vcombine.high %v562, %v578
      %v621 = vunpack.c.l.s4 1934713408
      %v622 = vunpack.c.0.s8 %v621
      %v623 = vlaneseq
      %v624 = vshrl.u32 %v623, 7
      %v625 = vsub.s32 %v622, %v624
      %v626 = vrot.slane %v618, %v625
      %v628 = vunpack.c.l.s4 1934713408
      %v629 = vunpack.c.0.s8 %v628
      %v630 = vlaneseq
      %v631 = vshrl.u32 %v630, 7
      %v632 = vsub.s32 %v629, %v631
      %v633 = vrot.slane %v619, %v632
      %v634 = vcombine.low %v569, %v585
      %v635 = vcombine.high %v569, %v585
      %v637 = vunpack.c.l.s4 1934713408
      %v638 = vunpack.c.0.s8 %v637
      %v639 = vlaneseq
      %v640 = vshrl.u32 %v639, 7
      %v641 = vsub.s32 %v638, %v640
      %v642 = vrot.slane %v634, %v641
      %v644 = vunpack.c.l.s4 1934713408
      %v645 = vunpack.c.0.s8 %v644
      %v646 = vlaneseq
      %v647 = vshrl.u32 %v646, 7
      %v648 = vsub.s32 %v645, %v647
      %v649 = vrot.slane %v635, %v648
      %v650 = vcombine.low %v594, %v626
      %v651 = vcombine.high %v594, %v626
      %v652 = vcombine.low %v601, %v633
      %v653 = vcombine.high %v601, %v633
      %v654 = vcombine.low %v610, %v642
      %v655 = vcombine.high %v610, %v642
      %v656 = vcombine.low %v617, %v649
      %v657 = vcombine.high %v617, %v649
      %666 = vrot.lane.b32.xlu0 %v650, 32
      %v667 = vpop.permute.xlu0 %666
      %668 = vrot.lane.b32.xlu0 %v651, 32
      %v669 = vpop.permute.xlu0 %668
      %670 = vrot.lane.b32.xlu0 %v652, 32
      %v671 = vpop.permute.xlu0 %670
      %672 = vrot.lane.b32.xlu0 %v653, 32
      %v673 = vpop.permute.xlu0 %672
      %674 = vrot.lane.b32.xlu0 %v654, 32
      %v675 = vpop.permute.xlu0 %674
      %676 = vrot.lane.b32.xlu0 %v655, 32
      %v677 = vpop.permute.xlu0 %676
      %678 = vrot.lane.b32.xlu0 %v656, 32
      %v679 = vpop.permute.xlu0 %678
      %680 = vrot.lane.b32.xlu0 %v657, 32
      %v681 = vpop.permute.xlu0 %680
      %vm690 = vcmask 261120
      %v691 = vsel %vm690, %v494, %v667
      %v692 = vsel %vm690, %v495, %v669
      %v693 = vsel %vm690, %v496, %v671
      %v694 = vsel %vm690, %v497, %v673
      %v695 = vsel %vm690, %v498, %v675
      %v696 = vsel %vm690, %v499, %v677
      %v697 = vsel %vm690, %v500, %v679
      %v698 = vsel %vm690, %v501, %v681
      %v699 = vcombine.low %v691, %v693
      %v700 = vcombine.high %v691, %v693
      %v702 = vunpack.c.l.s4 1983009808
      %v703 = vunpack.c.0.s8 %v702
      %v704 = vlaneseq
      %v705 = vshrl.u32 %v704, 7
      %v706 = vsub.s32 %v703, %v705
      %v707 = vrot.slane %v699, %v706
      %v709 = vunpack.c.l.s4 1983009808
      %v710 = vunpack.c.0.s8 %v709
      %v711 = vlaneseq
      %v712 = vshrl.u32 %v711, 7
      %v713 = vsub.s32 %v710, %v712
      %v714 = vrot.slane %v700, %v713
      %v715 = vcombine.low %v692, %v694
      %v716 = vcombine.high %v692, %v694
      %v718 = vunpack.c.l.s4 1983009808
      %v719 = vunpack.c.0.s8 %v718
      %v720 = vlaneseq
      %v721 = vshrl.u32 %v720, 7
      %v722 = vsub.s32 %v719, %v721
      %v723 = vrot.slane %v715, %v722
      %v725 = vunpack.c.l.s4 1983009808
      %v726 = vunpack.c.0.s8 %v725
      %v727 = vlaneseq
      %v728 = vshrl.u32 %v727, 7
      %v729 = vsub.s32 %v726, %v728
      %v730 = vrot.slane %v716, %v729
      %v731 = vcombine.low %v695, %v697
      %v732 = vcombine.high %v695, %v697
      %v734 = vunpack.c.l.s4 1983009808
      %v735 = vunpack.c.0.s8 %v734
      %v736 = vlaneseq
      %v737 = vshrl.u32 %v736, 7
      %v738 = vsub.s32 %v735, %v737
      %v739 = vrot.slane %v731, %v738
      %v741 = vunpack.c.l.s4 1983009808
      %v742 = vunpack.c.0.s8 %v741
      %v743 = vlaneseq
      %v744 = vshrl.u32 %v743, 7
      %v745 = vsub.s32 %v742, %v744
      %v746 = vrot.slane %v732, %v745
      %v747 = vcombine.low %v696, %v698
      %v748 = vcombine.high %v696, %v698
      %v750 = vunpack.c.l.s4 1983009808
      %v751 = vunpack.c.0.s8 %v750
      %v752 = vlaneseq
      %v753 = vshrl.u32 %v752, 7
      %v754 = vsub.s32 %v751, %v753
      %v755 = vrot.slane %v747, %v754
      %v757 = vunpack.c.l.s4 1983009808
      %v758 = vunpack.c.0.s8 %v757
      %v759 = vlaneseq
      %v760 = vshrl.u32 %v759, 7
      %v761 = vsub.s32 %v758, %v760
      %v762 = vrot.slane %v748, %v761
      %v763 = vcombine.low %v707, %v723
      %v764 = vcombine.high %v707, %v723
      %v766 = vunpack.c.l.s4 1934713408
      %v767 = vunpack.c.0.s8 %v766
      %v768 = vlaneseq
      %v769 = vshrl.u32 %v768, 7
      %v770 = vsub.s32 %v767, %v769
      %v771 = vrot.slane %v763, %v770
      %v773 = vunpack.c.l.s4 1934713408
      %v774 = vunpack.c.0.s8 %v773
      %v775 = vlaneseq
      %v776 = vshrl.u32 %v775, 7
      %v777 = vsub.s32 %v774, %v776
      %v778 = vrot.slane %v764, %v777
      %v779 = vcombine.low %v714, %v730
      %v780 = vcombine.high %v714, %v730
      %v782 = vunpack.c.l.s4 1934713408
      %v783 = vunpack.c.0.s8 %v782
      %v784 = vlaneseq
      %v785 = vshrl.u32 %v784, 7
      %v786 = vsub.s32 %v783, %v785
      %v787 = vrot.slane %v779, %v786
      %v789 = vunpack.c.l.s4 1934713408
      %v790 = vunpack.c.0.s8 %v789
      %v791 = vlaneseq
      %v792 = vshrl.u32 %v791, 7
      %v793 = vsub.s32 %v790, %v792
      %v794 = vrot.slane %v780, %v793
      %v795 = vcombine.low %v739, %v755
      %v796 = vcombine.high %v739, %v755
      %v798 = vunpack.c.l.s4 1934713408
      %v799 = vunpack.c.0.s8 %v798
      %v800 = vlaneseq
      %v801 = vshrl.u32 %v800, 7
      %v802 = vsub.s32 %v799, %v801
      %v803 = vrot.slane %v795, %v802
      %v805 = vunpack.c.l.s4 1934713408
      %v806 = vunpack.c.0.s8 %v805
      %v807 = vlaneseq
      %v808 = vshrl.u32 %v807, 7
      %v809 = vsub.s32 %v806, %v808
      %v810 = vrot.slane %v796, %v809
      %v811 = vcombine.low %v746, %v762
      %v812 = vcombine.high %v746, %v762
      %v814 = vunpack.c.l.s4 1934713408
      %v815 = vunpack.c.0.s8 %v814
      %v816 = vlaneseq
      %v817 = vshrl.u32 %v816, 7
      %v818 = vsub.s32 %v815, %v817
      %v819 = vrot.slane %v811, %v818
      %v821 = vunpack.c.l.s4 1934713408
      %v822 = vunpack.c.0.s8 %v821
      %v823 = vlaneseq
      %v824 = vshrl.u32 %v823, 7
      %v825 = vsub.s32 %v822, %v824
      %v826 = vrot.slane %v812, %v825
      %v827 = vcombine.low %v771, %v803
      %v828 = vcombine.high %v771, %v803
      %v829 = vcombine.low %v778, %v810
      %v830 = vcombine.high %v778, %v810
      %v831 = vcombine.low %v787, %v819
      %v832 = vcombine.high %v787, %v819
      %v833 = vcombine.low %v794, %v826
      %v834 = vcombine.high %v794, %v826
      %836 = vrot.lane.b32.xlu0 %v828, 64
      %v837 = vpop.permute.xlu0 %836
      %840 = vrot.lane.b32.xlu0 %v830, 64
      %v841 = vpop.permute.xlu0 %840
      %844 = vrot.lane.b32.xlu0 %v832, 64
      %v845 = vpop.permute.xlu0 %844
      %848 = vrot.lane.b32.xlu0 %v834, 64
      %v849 = vpop.permute.xlu0 %848
      %vm851 = vcmask 523264
      %v852 = vsel %vm851, %v827, %v837
      %v853 = vsel %vm851, %v829, %v841
      %v854 = vsel %vm851, %v831, %v845
      %v855 = vsel %vm851, %v833, %v849
      %856 = vst [vmem:[%s192] sm:$0xff] %v852
      %857 = vst [vmem:[%s192 + $0x8] sm:$0xff] %v853
      %858 = vst [vmem:[%s192 + $0x10] sm:$0xff] %v854
      %859 = vst [vmem:[%s192 + $0x18] sm:$0xff] %v855
      %s860 = smul.u32 4, %s19
      %p861 = scmp.lt.s32.totalorder %s18, 1
      %s862 = scalar_select %p861, %s18, 1
      %p863 = scmp.lt.s32.totalorder %s860, 7
      %s864 = scalar_select %p863, %s860, 7
      %s865 = smul.addr %s862, 8
      %s866 = sadd.s32 %s864, %s865
      %s867 = smul.addr %s866, 8
      %s868 = scalar_lea.vmem %s3, %s867
      // Predicated region
      $region33: #{last_decoder_block.1} parent=31 // pred_check
        %p869 = pneg %p114
      $region34: #{last_decoder_block.1} parent=31 // pred_check_branch
        %871 = sbr.rel (%p869) target = $region36
      $region35: #{last_decoder_block.1} parent=31 // pred_region
        %s872 = smul.u32 4, %s19
      $region36: #{last_decoder_block.1} parent=31 // pred_fallthru
        _
    $region32: #{last_decoder_block.1} parent=5 // pred_fallthru
      _
    %p873 = scmp.le.s32.totalorder 2, %s9
    // Predicated region
    $region37: #{last_decoder_block.1} parent=5 // pred_check
      %p874 = pneg %p873
    $region38: #{last_decoder_block.1} parent=5 // pred_check_branch
      %876 = sbr.rel (%p874) target = $region40
    $region39: #{last_decoder_block.1} parent=5 // pred_region
      %s877 = ssub.s32 %s9, 2
      // Predicated region
      $region41: #{last_decoder_block.1} parent=39 // pred_check
        %p878 = pneg %p120
      $region42: #{last_decoder_block.1} parent=39 // pred_check_branch
        %880 = sbr.rel (%p878) target = $region44
      $region43: #{last_decoder_block.1} parent=39 // pred_region
        %s881 = smul.u32 4, %s21
        %p882 = scmp.lt.s32.totalorder %s20, 1
        %s883 = scalar_select %p882, %s20, 1
        %p884 = scmp.lt.s32.totalorder %s881, 7
        %s885 = scalar_select %p884, %s881, 7
        %s886 = smul.addr %s883, 8
        %s887 = sadd.s32 %s885, %s886
        %s888 = smul.addr %s887, 8
        %s889 = scalar_lea.vmem %s3, %s888
      $region44: #{last_decoder_block.1} parent=39 // pred_fallthru
        _
    $region40: #{last_decoder_block.1} parent=5 // pred_fallthru
      _
  $region6: #{last_decoder_block.1} parent=0 // loop_footer
    %s13 = sadd.s32 1, %s9
  $region7: #{last_decoder_block.1} parent=0 // loop_footer_branch
    %8 = sbr.rel target = $region3
  $region8: #{last_decoder_block.1} parent=0 // loop_exit
    _

</llo_original>
